<compile_context>
chip_gen: v6e
topology: v6e:2x2x1
jax: 0.10.0
libtpu: 0.0.40
codegen_flags: <defaults>
</compile_context>

<pallas_src>
import functools
import math

import jax
import jax.numpy as jnp
from jax.experimental import pallas as pl
from jax.experimental.pallas import tpu as pltpu


S_SCALE = 30.0
M_MARGIN = 0.2
# Margin folded into a trace-time constant (see header note).
_ONE_MINUS_EXP_NEG_SM = 1.0 - math.exp(-S_SCALE * M_MARGIN)


def _cosface_kernel(cos_ref, labels_ref, partial_ref, *, batch_size, tb):
    i = pl.program_id(0)

    cos = cos_ref[...].astype(jnp.float32)          # [TB, C]; single upcast per tile
    labels = labels_ref[...]                        # [TB, 1] int32
    TB, C = cos.shape

    # Target-class mask (no materialized float one_hot).
    col_ids = jax.lax.broadcasted_iota(jnp.int32, (TB, C), 1)
    tgt = col_ids == labels                         # [TB, C] bool

    # Margin-folded, numerically stable CosFace cross-entropy.
    row_max = jnp.max(cos, axis=1, keepdims=True)               # [TB, 1]
    e = jnp.exp((cos - row_max) * S_SCALE)                      # [TB, C]  (EUP)
    sum_e = jnp.sum(e, axis=1, keepdims=True)                   # [TB, 1]
    e_t = jnp.sum(jnp.where(tgt, e, 0.0), axis=1, keepdims=True)  # [TB, 1]

    per_example = (
        jnp.log(sum_e - e_t * _ONE_MINUS_EXP_NEG_SM)
        - jnp.log(e_t)
        + S_SCALE * M_MARGIN
    )                                                           # [TB, 1]

    # Drop padded rows of a partial final tile.  Any NaN/Inf produced from
    # the uninitialized padding stays in the unselected branch of the select
    # and never contaminates valid rows (all math above is row-local).
    row_ids = jax.lax.broadcasted_iota(jnp.int32, (TB, 1), 0) + i * tb
    per_example = jnp.where(row_ids < batch_size, per_example, 0.0)

    # One (8,128)-aligned, lane-dense store per tile: the tile's partial sum
    # broadcast across the block (unmasked vst; wrapper reads element [0,0]).
    tile_sum = jnp.sum(per_example, keepdims=True)              # (1, 1)
    partial_ref[...] = jnp.broadcast_to(tile_sum, partial_ref.shape)


def _round_up(x, m):
    return (x + m - 1) // m * m


def _vmem_config():
    """Generation-aware (vmem_limit_bytes, tile_budget_bytes)."""
    try:
        cap = pltpu.get_tpu_info().vmem_capacity_bytes
    except Exception:
        cap = 64 * 1024 * 1024          # unknown: assume the smaller (v7x) VMEM
    if cap >= 96 * 1024 * 1024:         # v5e / v6e class: 128 MiB per core
        return 64 * 1024 * 1024, 48 * 1024 * 1024
    return 32 * 1024 * 1024, 24 * 1024 * 1024   # v7x class: 64 MiB per core


def _pick_batch_tile(batch, classes, in_itemsize, sub, budget):
    """Largest sublane-aligned TB whose working set fits `budget` bytes.

    Per-row working set: double-buffered cos block (2 * C_pad * itemsize),
    double-buffered labels block (lane-padded to 128), and ~5 live f32
    [TB, C]-sized temporaries (upcast, exp, iota, mask/select).  With the
    24/48 MiB budgets this puts cos blocks in the ~4-8 MiB range.
    """
    c_pad = _round_up(classes, 128)
    bytes_per_row = c_pad * (2 * in_itemsize + 5 * 4) + 2 * 128 * 4
    tb = budget // max(bytes_per_row, 1)
    tb = max(sub, (tb // sub) * sub)            # round DOWN to stay in budget
    # Never bigger than the (sublane-rounded) batch itself.
    tb = min(tb, _round_up(batch, sub))
    # Prefer >= 2 grid steps (keeps both v7x TensorCores busy and balances a
    # ragged tail) as long as each cos block stays >= ~1 MiB.
    half = _round_up((batch + 1) // 2, sub)
    if half * c_pad * in_itemsize >= (1 << 20):
        tb = min(tb, half)
    return max(sub, tb)


def cosface_loss(cos, labels, *, tb=None):
    """cos: [B, C] float32 or bfloat16, labels: [B] int -> scalar f32 loss."""
    B, C = cos.shape
    itemsize = jnp.dtype(cos.dtype).itemsize
    # Sublane packing multiple: 8 for 4-byte dtypes, 16 for 2-byte (bf16).
    sub = 8 if itemsize >= 4 else 16

    vmem_limit, budget = _vmem_config()
    if tb is None:
        tb = _pick_batch_tile(B, C, itemsize, sub, budget)
    tb = _round_up(max(int(tb), sub), sub)
    n_tiles = pl.cdiv(B, tb)

    labels2d = labels.reshape(B, 1).astype(jnp.int32)
    kernel = functools.partial(_cosface_kernel, batch_size=B, tb=tb)

    partials = pl.pallas_call(
        kernel,
        # One fully (8,128)-aligned block per tile; element [8*i, 0] holds
        # tile i's partial sum.
        out_shape=jax.ShapeDtypeStruct((8 * n_tiles, 128), jnp.float32),
        grid_spec=pltpu.PrefetchScalarGridSpec(
            num_scalar_prefetch=0,
            grid=(n_tiles,),
            in_specs=[
                pl.BlockSpec((tb, C), lambda i: (i, 0)),   # cos tile (streamed)
                pl.BlockSpec((tb, 1), lambda i: (i, 0)),   # labels tile
            ],
            out_specs=pl.BlockSpec((8, 128), lambda i: (i, 0)),
        ),
        compiler_params=pltpu.CompilerParams(
            # Independent per-tile partials -> megacore sharding on v7x.
            dimension_semantics=("parallel",),
            vmem_limit_bytes=vmem_limit,
        ),
    )(cos, labels2d)

    # Tiny final reduction in JAX (better accumulation than a single f32
    # accumulator carried across the whole grid).
    per_tile = partials.reshape(n_tiles, 8, 128)[:, 0, 0]
    return jnp.sum(per_tile) / jnp.float32(B)


def cosface_loss_ref(cos, labels):
    """Pure-JAX reference mirroring the PyTorch module."""
    B, C = cos.shape
    cos = cos.astype(jnp.float32)
    one_hot = jax.nn.one_hot(labels, C, dtype=jnp.float32)
    output = S_SCALE * (cos - one_hot * M_MARGIN)
    logp = jax.nn.log_softmax(output, axis=1)
    loss = -jnp.take_along_axis(logp, labels.reshape(-1, 1), axis=1)
    return loss.mean()


if __name__ == "__main__":
    key = jax.random.PRNGKey(0)
    k1, k2 = jax.random.split(key)

    B, C = 20, 128  # small; B deliberately NOT a multiple of the batch tile
    cos = jnp.tanh(jax.random.normal(k1, (B, C), dtype=jnp.float32))
    labels = jax.random.randint(k2, (B,), 0, C, dtype=jnp.int32)

    ref = cosface_loss_ref(cos, labels)

    # f32 path, forced multi-tile grid (tb=8 -> 3 tiles, last one partial).
    loss_tiled = jax.block_until_ready(cosface_loss(cos, labels, tb=8))
    assert jnp.allclose(loss_tiled, ref, rtol=5e-5, atol=5e-5), (loss_tiled, ref)

    # f32 path with auto tile-size selection (single tile here).
    loss_auto = jax.block_until_ready(cosface_loss(cos, labels))
    assert jnp.allclose(loss_auto, ref, rtol=5e-5, atol=5e-5), (loss_auto, ref)

    # bf16 input path (half the HBM traffic; upcast to f32 inside the kernel).
    cos_bf16 = cos.astype(jnp.bfloat16)
    ref_bf16 = cosface_loss_ref(cos_bf16, labels)
    loss_bf16 = jax.block_until_ready(cosface_loss(cos_bf16, labels))
    assert jnp.allclose(loss_bf16, ref_bf16, rtol=1e-4, atol=1e-4), (loss_bf16, ref_bf16)

    print("KERNEL_OK")
</pallas_src>

<mosaic_0001>
module attributes {stable_mosaic.version = 11 : i64} {
  func.func @_cosface_kernel(%arg0: i32, %arg1: memref<8x128xf32, #tpu.memory_space<vmem>>, %arg2: memref<8x1xi32, #tpu.memory_space<vmem>>, %arg3: memref<8x128xf32, #tpu.memory_space<vmem>>) attributes {dimension_semantics = [#tpu.dimension_semantics<parallel>], iteration_bounds = array<i64: 3>, scalar_prefetch = 0 : i64, scratch_operands = 0 : i64, tpu.core_type = #tpu.core_type<tc>, window_params = [{transform_indices = @transform_0, window_bounds = array<i64: 8, 128>}, {transform_indices = @transform_1, window_bounds = array<i64: 8, 1>}, {transform_indices = @transform_2, window_bounds = array<i64: 8, 128>}]} {
    %c0 = arith.constant 0 : index
    %c0_0 = arith.constant 0 : index
    %0 = vector.load %arg1[%c0, %c0_0] : memref<8x128xf32, #tpu.memory_space<vmem>>, vector<8x128xf32>
    %c0_1 = arith.constant 0 : index
    %c0_2 = arith.constant 0 : index
    %1 = vector.load %arg2[%c0_1, %c0_2] : memref<8x1xi32, #tpu.memory_space<vmem>>, vector<8x1xi32>
    %2 = tpu.iota {dimensions = array<i32: 1>} : vector<8x128xi32>
    %3 = vector.broadcast %1 : vector<8x1xi32> to vector<8x128xi32>
    %4 = arith.cmpi eq, %2, %3 : vector<8x128xi32>
    %cst = arith.constant dense<0xFF800000> : vector<8xf32>
    %5 = vector.multi_reduction <maximumf>, %0, %cst [1] : vector<8x128xf32> to vector<8xf32>
    %6 = vector.shape_cast %5 : vector<8xf32> to vector<8x1xf32>
    %7 = vector.broadcast %6 : vector<8x1xf32> to vector<8x128xf32>
    %8 = arith.subf %0, %7 : vector<8x128xf32>
    %cst_3 = arith.constant 3.000000e+01 : f32
    %9 = vector.broadcast %cst_3 : f32 to vector<8x128xf32>
    %10 = arith.mulf %8, %9 : vector<8x128xf32>
    %11 = math.exp %10 : vector<8x128xf32>
    %cst_4 = arith.constant dense<0.000000e+00> : vector<8xf32>
    %12 = vector.multi_reduction <add>, %11, %cst_4 [1] : vector<8x128xf32> to vector<8xf32>
    %13 = vector.shape_cast %12 : vector<8xf32> to vector<8x1xf32>
    %cst_5 = arith.constant 0.000000e+00 : f32
    %14 = vector.broadcast %cst_5 : f32 to vector<8x128xf32>
    %15 = arith.select %4, %11, %14 : vector<8x128xi1>, vector<8x128xf32>
    %cst_6 = arith.constant dense<0.000000e+00> : vector<8xf32>
    %16 = vector.multi_reduction <add>, %15, %cst_6 [1] : vector<8x128xf32> to vector<8xf32>
    %17 = vector.shape_cast %16 : vector<8xf32> to vector<8x1xf32>
    %cst_7 = arith.constant 0.997521221 : f32
    %18 = vector.broadcast %cst_7 : f32 to vector<8x1xf32>
    %19 = arith.mulf %17, %18 : vector<8x1xf32>
    %20 = arith.subf %13, %19 : vector<8x1xf32>
    %21 = math.log %20 : vector<8x1xf32>
    %22 = math.log %17 : vector<8x1xf32>
    %23 = arith.subf %21, %22 : vector<8x1xf32>
    %cst_8 = arith.constant 6.000000e+00 : f32
    %24 = vector.broadcast %cst_8 : f32 to vector<8x1xf32>
    %25 = arith.addf %23, %24 : vector<8x1xf32>
    %26 = tpu.iota {dimensions = array<i32: 0>} : vector<8x1xi32>
    %c8_i32 = arith.constant 8 : i32
    %27 = arith.muli %arg0, %c8_i32 : i32
    %28 = vector.broadcast %27 : i32 to vector<8x1xi32>
    %29 = arith.addi %26, %28 : vector<8x1xi32>
    %c20_i32 = arith.constant 20 : i32
    %30 = vector.broadcast %c20_i32 : i32 to vector<8x1xi32>
    %31 = arith.cmpi slt, %29, %30 : vector<8x1xi32>
    %cst_9 = arith.constant 0.000000e+00 : f32
    %32 = vector.broadcast %cst_9 : f32 to vector<8x1xf32>
    %33 = arith.select %31, %25, %32 : vector<8x1xi1>, vector<8x1xf32>
    %34 = vector.shape_cast %33 : vector<8x1xf32> to vector<1x8x1xf32>
    %cst_10 = arith.constant dense<0.000000e+00> : vector<1xf32>
    %35 = vector.multi_reduction <add>, %34, %cst_10 [1, 2] : vector<1x8x1xf32> to vector<1xf32>
    %36 = vector.shape_cast %35 : vector<1xf32> to vector<1x1x1xf32>
    %37 = vector.extract %36[0, 0, 0] : f32 from vector<1x1x1xf32>
    %38 = vector.broadcast %37 : f32 to vector<1x1xf32>
    %39 = vector.shape_cast %38 : vector<1x1xf32> to vector<1x1xf32>
    %40 = vector.broadcast %39 : vector<1x1xf32> to vector<8x128xf32>
    %c0_11 = arith.constant 0 : index
    %c0_12 = arith.constant 0 : index
    %41 = vector.load %arg3[%c0_11, %c0_12] : memref<8x128xf32, #tpu.memory_space<vmem>>, vector<8x128xf32>
    tpu.vector_store %arg3[%c0_11, %c0_12], %40 {strides = array<i32>} : memref<8x128xf32, #tpu.memory_space<vmem>>, vector<8x128xf32>,
    return
  }
  func.func @transform_0(%arg0: i32) -> (i32, i32) {
    %c0_i32 = arith.constant 0 : i32
    %c0_i32_0 = arith.constant 0 : i32
    return %arg0, %c0_i32 : i32, i32
  }
  func.func @transform_1(%arg0: i32) -> (i32, i32) {
    %c0_i32 = arith.constant 0 : i32
    %c0_i32_0 = arith.constant 0 : i32
    return %arg0, %c0_i32 : i32, i32
  }
  func.func @transform_2(%arg0: i32) -> (i32, i32) {
    %c0_i32 = arith.constant 0 : i32
    %c0_i32_0 = arith.constant 0 : i32
    return %arg0, %c0_i32 : i32, i32
  }
}

</mosaic_0001>

<llo_original>
// kernel: tpu_custom_call.1
$region0: #{tpu_custom_call.1}
  #allocation0 [shape = 'u32[]', space=smem, size = 0x4, offset = 0x4, fixed_abs, tag = 'smem constant byte address 0x4 - core index']
  #allocation1 [shape = 'u32[144,128]{1,0:T(1,128)}', space=vmem, size = 0x12000, scoped, tag = 'internal scratch']
  %s0 = inlined_call_operand.vmem [shape: f32[20,128], index: 0, kind: input, shape index: {}]
  %s1 = inlined_call_operand.vmem [shape: s32[20,1], index: 1, kind: input, shape index: {}]
  %s2 = inlined_call_operand.hbm [shape: f32[24,128], index: 2, kind: output, shape index: {}]
  %s3 = sld [smem:[#allocation0]]
  $region41: #{tpu_custom_call.1} parent=0
    _
  %s5 = ssub.s32 1, %s3
  %s6 = scalar_select 0, %s5, %s3
  $region1: #{tpu_custom_call.1} parent=0
    #allocation2 [shape = 'u8[8192]{0}', space=vmem, size = 0x2000, scoped, tag = 'output window, operand 0']
    #allocation3 [shape = 's32[2]{0}', space=sflag, size = 0x8, scoped, tag = 'scoped memory for tpu_custom_call.1']
    %7 = vsyncpa [#allocation3], 0
    %s8 = scalar_lea.sflag [#allocation3], 1
    %9 = vsyncpa %s8, 0
    loop: start=0, step=1, limit=5
    $region2: #{tpu_custom_call.1} parent=1 // loop_pre_header
      _
    $region3: #{tpu_custom_call.1} parent=1 // loop_header
      %s11 = sphi 0, %s15
      %p12 = scmp.ge.s32.totalorder %s11, 5
      %s21 = sphi 0, %s23
      %s24 = sphi 0, %s21
      %s25 = sphi 0, %s24
      %s41 = sphi 0, %s25
      %s47 = sphi 0, %s49
      %s50 = sphi 0, %s47
      %s51 = sphi 0, %s50
      %s67 = sphi 0, %s51
      %s73 = sphi 0, %s75
      %s76 = sphi 0, %s73
      %s77 = sphi 0, %s76
      %s93 = sphi 0, %s77
    $region4: #{tpu_custom_call.1} parent=1 // loop_header_branch
      %14 = sbr.rel (%p12) target = $region8
    $region5: #{tpu_custom_call.1} parent=1 // loop_body
      %s16 = ssub.s32 %s11, 1
      %s17 = ssub.s32 %s11, 2
      %s18 = sadd.s32 %s11, 1
      %s19 = ssub.s32 %s11, %s18
      %p20 = scmp.eq.s32.totalorder %s19, 0
      %s22 = sadd.s32 %s21, 1
      %s23 = scalar_select %p20, %s21, %s22
      %p26 = pneg %p20
      %p27 = scmp.eq.s32.totalorder %s11, 2
      %p28 = por %p26, %p27
      %p29 = scmp.ne.s32.totalorder %s21, %s24
      %p30 = scmp.eq.s32.totalorder %s11, 0
      %p31 = por %p29, %p30
      %p32 = scmp.ne.s32.totalorder %s21, %s24
      %p33 = scmp.eq.s32.totalorder %s16, 2
      %p34 = por %p32, %p33
      %p35 = scmp.ne.s32.totalorder %s24, %s25
      %p36 = scmp.eq.s32.totalorder %s16, 0
      %p37 = por %p35, %p36
      %p38 = scmp.ne.s32.totalorder %s24, %s25
      %p39 = scmp.eq.s32.totalorder %s17, 2
      %p40 = por %p38, %p39
      %p42 = scmp.ne.s32.totalorder %s25, %s41
      %p43 = scmp.eq.s32.totalorder %s17, 0
      %p44 = por %p42, %p43
      %s45 = ssub.s32 %s11, %s18
      %p46 = scmp.eq.s32.totalorder %s45, 0
      %s48 = sadd.s32 %s47, 1
      %s49 = scalar_select %p46, %s47, %s48
      %p52 = pneg %p46
      %p53 = scmp.eq.s32.totalorder %s11, 2
      %p54 = por %p52, %p53
      %p55 = scmp.ne.s32.totalorder %s47, %s50
      %p56 = scmp.eq.s32.totalorder %s11, 0
      %p57 = por %p55, %p56
      %p58 = scmp.ne.s32.totalorder %s47, %s50
      %p59 = scmp.eq.s32.totalorder %s16, 2
      %p60 = por %p58, %p59
      %p61 = scmp.ne.s32.totalorder %s50, %s51
      %p62 = scmp.eq.s32.totalorder %s16, 0
      %p63 = por %p61, %p62
      %p64 = scmp.ne.s32.totalorder %s50, %s51
      %p65 = scmp.eq.s32.totalorder %s17, 2
      %p66 = por %p64, %p65
      %p68 = scmp.ne.s32.totalorder %s51, %s67
      %p69 = scmp.eq.s32.totalorder %s17, 0
      %p70 = por %p68, %p69
      %s71 = ssub.s32 %s11, %s18
      %p72 = scmp.eq.s32.totalorder %s71, 0
      %s74 = sadd.s32 %s73, 1
      %s75 = scalar_select %p72, %s73, %s74
      %p78 = pneg %p72
      %p79 = scmp.eq.s32.totalorder %s11, 2
      %p80 = por %p78, %p79
      %p81 = scmp.ne.s32.totalorder %s73, %s76
      %p82 = scmp.eq.s32.totalorder %s11, 0
      %p83 = por %p81, %p82
      %p84 = scmp.ne.s32.totalorder %s73, %s76
      %p85 = scmp.eq.s32.totalorder %s16, 2
      %p86 = por %p84, %p85
      %p87 = scmp.ne.s32.totalorder %s76, %s77
      %p88 = scmp.eq.s32.totalorder %s16, 0
      %p89 = por %p87, %p88
      %p90 = scmp.ne.s32.totalorder %s76, %s77
      %p91 = scmp.eq.s32.totalorder %s17, 2
      %p92 = por %p90, %p91
      %p94 = scmp.ne.s32.totalorder %s77, %s93
      %p95 = scmp.eq.s32.totalorder %s17, 0
      %p96 = por %p94, %p95
      %p97 = scmp.le.s32.totalorder 1, %s11
      %p98 = scmp.lt.s32.totalorder %s11, 4
      %p99 = pnand %p97, %p98
      %p100 = pneg %p99
      // Predicated region
      $region9: #{tpu_custom_call.1} parent=5 // pred_check
        _
      $region10: #{tpu_custom_call.1} parent=5 // pred_check_branch
        %102 = sbr.rel (%p99) target = $region12
      $region11: #{tpu_custom_call.1} parent=5 // pred_region
        %s103 = ssub.s32 %s11, 1
      $region12: #{tpu_custom_call.1} parent=5 // pred_fallthru
        _
      %p104 = scmp.lt.s32.totalorder %s11, 3
      // Predicated region
      $region13: #{tpu_custom_call.1} parent=5 // pred_check
        %p105 = pneg %p104
      $region14: #{tpu_custom_call.1} parent=5 // pred_check_branch
        %107 = sbr.rel (%p105) target = $region16
      $region15: #{tpu_custom_call.1} parent=5 // pred_region
        // Predicated region
        $region17: #{tpu_custom_call.1} parent=15 // pred_check
          %p108 = pneg %p31
        $region18: #{tpu_custom_call.1} parent=15 // pred_check_branch
          %110 = sbr.rel (%p108) target = $region20
        $region19: #{tpu_custom_call.1} parent=15 // pred_region
          %p111 = scmp.lt.s32.totalorder %s11, 2
          %s112 = scalar_select %p111, %s11, 2
          %s113 = smul.addr %s112, 8
          %s114 = scalar_lea.vmem %s0, %s113
        $region20: #{tpu_custom_call.1} parent=15 // pred_fallthru
          _
        // Predicated region
        $region21: #{tpu_custom_call.1} parent=15 // pred_check
          %p115 = pneg %p57
        $region22: #{tpu_custom_call.1} parent=15 // pred_check_branch
          %117 = sbr.rel (%p115) target = $region24
        $region23: #{tpu_custom_call.1} parent=15 // pred_region
          %p118 = scmp.lt.s32.totalorder %s11, 2
          %s119 = scalar_select %p118, %s11, 2
          %s120 = smul.addr %s119, 8
          %s121 = scalar_lea.vmem %s1, %s120
        $region24: #{tpu_custom_call.1} parent=15 // pred_fallthru
          _
      $region16: #{tpu_custom_call.1} parent=5 // pred_fallthru
        _
      %p122 = scmp.le.s32.totalorder 1, %s11
      %p123 = scmp.lt.s32.totalorder %s11, 4
      %p124 = pnand %p122, %p123
      %p125 = pneg %p124
      // Predicated region
      $region25: #{tpu_custom_call.1} parent=5 // pred_check
        _
      $region26: #{tpu_custom_call.1} parent=5 // pred_check_branch
        %127 = sbr.rel (%p124) target = $region28
      $region27: #{tpu_custom_call.1} parent=5 // pred_region
        %s128 = ssub.s32 %s11, 1
        %p129 = scmp.lt.s32.totalorder %s16, 2
        %s130 = scalar_select %p129, %s16, 2
        %s131 = smul.addr %s130, 8
        %s132 = scalar_lea.vmem %s0, %s131
        %p133 = pneg %p37
        %p134 = pneg %p34
        %p135 = scmp.lt.s32.totalorder %s16, 2
        %s136 = scalar_select %p135, %s16, 2
        %s137 = smul.addr %s136, 8
        %s138 = scalar_lea.vmem %s1, %s137
        %p139 = pneg %p63
        %p140 = pneg %p60
        %p141 = pneg %p89
        %p142 = pneg %p86
        %s143 = sand.u32 %s76, 1
        %s144 = scalar_lea.sflag [#allocation3], %s143
        %s145 = sand.u32 %s76, 1
        %s146 = smul.addr %s145, 8
        %s147 = scalar_lea.vmem [#allocation2], %s146
        %p148 = scmp.lt.s32.totalorder %s16, 2
        %s149 = scalar_select %p148, %s16, 2
        %s150 = smul.addr %s149, 8
        %s151 = scalar_lea.vmem %s0, %s150
        %p152 = scmp.lt.s32.totalorder %s16, 2
        %s153 = scalar_select %p152, %s16, 2
        %s154 = smul.addr %s153, 8
        %s155 = scalar_lea.vmem %s1, %s154
        %v156 = vld [vmem:[%s151] sm:$0xff]
        %v157 = vld [vmem:[%s155] sm:$0xff]
        %v158 = vlaneseq
        %v159 = vand.u32 %v158, 127
        %160 = vset.pattern.permute.xlu0 0
        %161 = vperm.xlu0 %160, %v157
        %v162 = vpop.permute.xlu0 %161
        %vm163 = vcmp.eq.s32.totalorder %v159, %v162
        %164 = vmax.xlane.f32.xlu0 %v156
        %v165 = vpop.xlane.xlu0 %164
        %v166 = vsub.f32 %v156, %v165
        %v167 = vmul.f32 %v166, 30.0
        %v168 = vmul.f32 %v167, 1.442695
        %v169 = vpow.pop %v168
        %170 = vadd.xlane.f32.xlu0 %v169
        %v171 = vpop.xlane.xlu0 %170
        %v172 = vsel %vm163, %v169, 0.0
        %173 = vadd.xlane.f32.xlu0 %v172
        %v174 = vpop.xlane.xlu0 %173
        %v175 = vmul.f32 %v174, 0.9975212
        %v176 = vsub.f32 %v171, %v175
        %v177 = vlog2.pop %v176
        %v178 = vmul.f32 %v177, 0.6931472
        %v179 = vlog2.pop %v174
        %v180 = vmul.f32 %v179, 0.6931472
        %v181 = vsub.f32 %v178, %v180
        %v182 = vadd.f32 %v181, 6.0
        %v183 = vlaneseq
        %v184 = vshrl.u32 %v183, 7
        %s185 = smul.u32 %s16, 8
        %v186 = vstv %s185
        %v187 = vadd.s32 %v184, %v186
        %vm188 = vcmp.lt.s32.totalorder %v187, 20
        %v189 = vsel %vm188, %v182, 0.0
        %vm190 = vcmask 7168
        %v191 = vsel %vm190, %v189, 0.0
        %192 = vadd.xlane.f32.xlu0 %v191
        %v193 = vpop.xlane.xlu0 %192
        %v194 = vrot.slane %v193, 4
        %v195 = vadd.f32 %v193, %v194
        %v196 = vrot.slane %v195, 2
        %v197 = vadd.f32 %v195, %v196
        %v198 = vrot.slane %v197, 1
        %v199 = vadd.f32 %v197, %v198
        %s200 = vtos %v199
        %v201 = vstv %s200
        %202 = vst [vmem:[%s147] sm:$0xff] %v201
        %s203 = sand.u32 %s76, 1
        %s204 = scalar_lea.sflag [#allocation3], %s203
        %s205 = sand.u32 %s76, 1
        %s206 = smul.addr %s205, 8
        %s207 = scalar_lea.vmem [#allocation2], %s206
        // Predicated region
        $region29: #{tpu_custom_call.1} parent=27 // pred_check
          %p208 = pneg %p86
        $region30: #{tpu_custom_call.1} parent=27 // pred_check_branch
          %210 = sbr.rel (%p208) target = $region32
        $region31: #{tpu_custom_call.1} parent=27 // pred_region
          %s212 = ssub.s32 128, 128
          %213 = vsyncadd %s204, %s212
          %s214 = smul.addr %s16, 128
          %s215 = scalar_lea.hbm %s2, %s214
          %s217 = sshll.u32 %s207, 4
          %s218 = int_to_ptr.vmem [resolvable:$true] %s217
          %220 = dma.vmem_to_hbm [thread:$0]  %s218, 128, %s215, %s204
        $region32: #{tpu_custom_call.1} parent=27 // pred_fallthru
          _
      $region28: #{tpu_custom_call.1} parent=5 // pred_fallthru
        _
      %p221 = scmp.le.s32.totalorder 2, %s11
      // Predicated region
      $region33: #{tpu_custom_call.1} parent=5 // pred_check
        %p222 = pneg %p221
      $region34: #{tpu_custom_call.1} parent=5 // pred_check_branch
        %224 = sbr.rel (%p222) target = $region36
      $region35: #{tpu_custom_call.1} parent=5 // pred_region
        %s225 = ssub.s32 %s11, 2
        // Predicated region
        $region37: #{tpu_custom_call.1} parent=35 // pred_check
          %p226 = pneg %p92
        $region38: #{tpu_custom_call.1} parent=35 // pred_check_branch
          %228 = sbr.rel (%p226) target = $region40
        $region39: #{tpu_custom_call.1} parent=35 // pred_region
          %s229 = sand.u32 %s77, 1
          %s230 = scalar_lea.sflag [#allocation3], %s229
          %s231 = sand.u32 %s77, 1
          %s232 = smul.addr %s231, 8
          %s233 = scalar_lea.vmem [#allocation2], %s232
          %234 = dma.done %s230, 128
        $region40: #{tpu_custom_call.1} parent=35 // pred_fallthru
          _
      $region36: #{tpu_custom_call.1} parent=5 // pred_fallthru
        _
    $region6: #{tpu_custom_call.1} parent=1 // loop_footer
      %s15 = sadd.s32 1, %s11
    $region7: #{tpu_custom_call.1} parent=1 // loop_footer_branch
      %10 = sbr.rel target = $region3
    $region8: #{tpu_custom_call.1} parent=1 // loop_exit
      _
    %235 = vsyncpa [#allocation3], 1
    %s236 = scalar_lea.sflag [#allocation3], 1
    %237 = vsyncpa %s236, 1

</llo_original>
